<compile_context>
chip_gen: v7x
topology: tpu7x:2x2x1
jax: 0.10.0
libtpu: 0.0.40
codegen_flags: <defaults>
</compile_context>

<pallas_src>
import functools

import jax
import jax.numpy as jnp
from jax.experimental import pallas as pl
from jax.experimental.pallas import tpu as pltpu

MARGIN = 0.1


def _round_up(x, m):
    return ((x + m - 1) // m) * m


def triplet_loss_kernel(x_ref, yt_ref, y_ref, out_ref, *, c_real, margin):
    # Similarity tile on the MXU: (TILE_N, D_pad) @ (D_pad, C_pad) -> f32.
    s = jax.lax.dot_general(
        x_ref[...], yt_ref[...],
        dimension_numbers=(((1,), (0,)), ((), ())),
        preferred_element_type=jnp.float32,
    )
    tn, c_pad = s.shape

    y = y_ref[...]                                            # (TILE_N, 1) int32; -1 == padded row
    col = jax.lax.broadcasted_iota(jnp.int32, (tn, c_pad), 1)
    col_valid = col < c_real                                  # mask out padded classes
    row_valid = y >= 0                                        # mask out padded rows

    is_pos = col == y
    # dist_ap for sample i (identical for every pair of that sample).
    s_ap = jnp.sum(jnp.where(is_pos, s, 0.0), axis=1, keepdims=True)

    neg = jnp.logical_and(col_valid, jnp.logical_not(is_pos))
    # Early-break (identity permutation): first negative j with
    # dist_ap - dist_an > margin ends the scan; that j is still included.
    break_cond = jnp.logical_and(neg, (s_ap - s) > margin)
    first_break = jnp.min(jnp.where(break_cond, col, c_pad), axis=1, keepdims=True)
    include = jnp.logical_and(jnp.logical_and(neg, col <= first_break), row_valid)

    # MarginRankingLoss with target = +1: relu(dist_an - dist_ap + margin).
    hinge = jnp.maximum(s - s_ap + margin, 0.0)
    row_sum = jnp.sum(jnp.where(include, hinge, 0.0), axis=1, keepdims=True)   # (TILE_N, 1)
    row_cnt = jnp.sum(include.astype(jnp.float32), axis=1, keepdims=True)      # (TILE_N, 1)

    lane = jax.lax.broadcasted_iota(jnp.int32, (tn, 2), 1)
    out_ref[...] = jnp.where(lane == 0, row_sum, row_cnt)                      # (TILE_N, 2)


def triplet_loss(inputs, Y, y_idxs, margin=MARGIN, tile_n=256):
    """inputs: (N, D) f32, Y: (C, D) f32, y_idxs: (N,) int -> scalar f32 loss."""
    N, D = inputs.shape
    C, D2 = Y.shape
    assert D == D2

    # Lane-dense / MXU-aligned padding.
    d_pad = _round_up(D, 128)
    c_pad = _round_up(C, 128)
    tile_n = _round_up(min(tile_n, _round_up(N, 8)), 8)
    n_pad = _round_up(N, tile_n)
    num_tiles = n_pad // tile_n

    # bf16 matmul operands, cast/padded/transposed in the wrapper (layout plumbing).
    x = jnp.zeros((n_pad, d_pad), jnp.bfloat16)
    x = x.at[:N, :D].set(inputs.astype(jnp.bfloat16))
    yt = jnp.zeros((d_pad, c_pad), jnp.bfloat16)
    yt = yt.at[:D, :C].set(Y.T.astype(jnp.bfloat16))
    y2d = jnp.full((n_pad, 1), -1, jnp.int32)
    y2d = y2d.at[:N, 0].set(y_idxs.astype(jnp.int32))

    kernel = functools.partial(triplet_loss_kernel, c_real=C, margin=float(margin))

    partials = pl.pallas_call(
        kernel,
        out_shape=jax.ShapeDtypeStruct((n_pad, 2), jnp.float32),
        grid_spec=pltpu.PrefetchScalarGridSpec(
            num_scalar_prefetch=0,
            grid=(num_tiles,),
            in_specs=[
                pl.BlockSpec((tile_n, d_pad), lambda i: (i, 0)),    # x: tiled over N
                pl.BlockSpec((d_pad, c_pad), lambda i: (0, 0)),     # Y^T: VMEM-resident
                pl.BlockSpec((tile_n, 1), lambda i: (i, 0)),        # labels: tiled with x
            ],
            out_specs=pl.BlockSpec((tile_n, 2), lambda i: (i, 0)),  # per-row partials
        ),
        compiler_params=pltpu.CompilerParams(
            dimension_semantics=("parallel",),        # distinct out block per step
            vmem_limit_bytes=48 * 1024 * 1024,        # safe on v5e/v6e/v7x
        ),
    )(x, yt, y2d)

    total = jnp.sum(partials[:, 0])
    count = jnp.sum(partials[:, 1])
    # Guard count == 0 (e.g. C == 1); the PyTorch original would error here.
    return total / jnp.maximum(count, 1.0)


def triplet_loss_ref(inputs, Y, y_idxs, margin=MARGIN):
    """Pure-JAX reference with identical deterministic (identity-perm, bf16 matmul) semantics."""
    s = jnp.dot(inputs.astype(jnp.bfloat16), Y.astype(jnp.bfloat16).T,
                preferred_element_type=jnp.float32)
    N, C = s.shape
    col = jnp.arange(C)[None, :]
    y = y_idxs.astype(jnp.int32)[:, None]
    is_pos = col == y
    s_ap = jnp.sum(jnp.where(is_pos, s, 0.0), axis=1, keepdims=True)
    neg = ~is_pos
    break_cond = neg & ((s_ap - s) > margin)
    first_break = jnp.min(jnp.where(break_cond, col, C), axis=1, keepdims=True)
    include = neg & (col <= first_break)
    hinge = jnp.maximum(s - s_ap + margin, 0.0)
    return jnp.sum(jnp.where(include, hinge, 0.0)) / jnp.maximum(jnp.sum(include), 1)


if __name__ == "__main__":
    key = jax.random.PRNGKey(0)
    k1, k2, k3 = jax.random.split(key, 3)

    N, C, D = 37, 12, 128        # batch, num classes (len(Y)), feature dim
    inputs = jax.random.normal(k1, (N, D), dtype=jnp.float32)
    Y = jax.random.normal(k2, (C, D), dtype=jnp.float32)       # deterministic "self.Y"
    y_idxs = jax.random.randint(k3, (N,), 0, C, dtype=jnp.int32)

    # tile_n=16 -> 3 grid steps: exercises N tiling + N/C padding + masking.
    loss = triplet_loss(inputs, Y, y_idxs, tile_n=16)
    jax.block_until_ready(loss)

    ref = triplet_loss_ref(inputs, Y, y_idxs)
    assert jnp.allclose(loss, ref, atol=1e-3, rtol=1e-3), (loss, ref)

    print("KERNEL_OK")
</pallas_src>

<mosaic_0001>
module attributes {stable_mosaic.version = 11 : i64} {
  func.func @triplet_loss_kernel(%arg0: i32, %arg1: memref<16x128xbf16, #tpu.memory_space<vmem>>, %arg2: memref<128x128xbf16, #tpu.memory_space<vmem>>, %arg3: memref<16x1xi32, #tpu.memory_space<vmem>>, %arg4: memref<16x2xf32, #tpu.memory_space<vmem>>) attributes {dimension_semantics = [#tpu.dimension_semantics<parallel>], iteration_bounds = array<i64: 3>, scalar_prefetch = 0 : i64, scratch_operands = 0 : i64, tpu.core_type = #tpu.core_type<tc>, window_params = [{transform_indices = @transform_0, window_bounds = array<i64: 16, 128>}, {pipeline_mode = #tpu.pipeline_mode<synchronous>, transform_indices = @transform_1, window_bounds = array<i64: 128, 128>}, {transform_indices = @transform_2, window_bounds = array<i64: 16, 1>}, {transform_indices = @transform_3, window_bounds = array<i64: 16, 2>}]} {
    %c0 = arith.constant 0 : index
    %c0_0 = arith.constant 0 : index
    %0 = vector.load %arg1[%c0, %c0_0] : memref<16x128xbf16, #tpu.memory_space<vmem>>, vector<16x128xbf16>
    %c0_1 = arith.constant 0 : index
    %c0_2 = arith.constant 0 : index
    %1 = vector.load %arg2[%c0_1, %c0_2] : memref<128x128xbf16, #tpu.memory_space<vmem>>, vector<128x128xbf16>
    %cst = arith.constant dense<0.000000e+00> : vector<16x128xf32>
    %2 = tpu.matmul %0, %1, %cst {dimension_numbers = #tpu.dot_dimension_numbers<[1], [0], [0], [1], [0, 0, 1, 1], [], []>} : vector<16x128xbf16>, vector<128x128xbf16>, vector<16x128xf32> -> vector<16x128xf32>
    %c0_3 = arith.constant 0 : index
    %c0_4 = arith.constant 0 : index
    %3 = vector.load %arg3[%c0_3, %c0_4] : memref<16x1xi32, #tpu.memory_space<vmem>>, vector<16x1xi32>
    %4 = tpu.iota {dimensions = array<i32: 1>} : vector<16x128xi32>
    %c12_i32 = arith.constant 12 : i32
    %5 = vector.broadcast %c12_i32 : i32 to vector<16x128xi32>
    %6 = arith.cmpi slt, %4, %5 : vector<16x128xi32>
    %c0_i32 = arith.constant 0 : i32
    %7 = vector.broadcast %c0_i32 : i32 to vector<16x1xi32>
    %8 = arith.cmpi sge, %3, %7 : vector<16x1xi32>
    %9 = vector.broadcast %3 : vector<16x1xi32> to vector<16x128xi32>
    %10 = arith.cmpi eq, %4, %9 : vector<16x128xi32>
    %cst_5 = arith.constant 0.000000e+00 : f32
    %11 = vector.broadcast %cst_5 : f32 to vector<16x128xf32>
    %12 = arith.select %10, %2, %11 : vector<16x128xi1>, vector<16x128xf32>
    %cst_6 = arith.constant dense<0.000000e+00> : vector<16xf32>
    %13 = vector.multi_reduction <add>, %12, %cst_6 [1] : vector<16x128xf32> to vector<16xf32>
    %14 = vector.shape_cast %13 : vector<16xf32> to vector<16x1xf32>
    %cst_7 = arith.constant dense<true> : vector<16x128xi1>
    %15 = arith.xori %10, %cst_7 : vector<16x128xi1>
    %16 = arith.andi %6, %15 : vector<16x128xi1>
    %17 = vector.broadcast %14 : vector<16x1xf32> to vector<16x128xf32>
    %18 = arith.subf %17, %2 : vector<16x128xf32>
    %cst_8 = arith.constant 1.000000e-01 : f32
    %19 = vector.broadcast %cst_8 : f32 to vector<16x128xf32>
    %20 = arith.cmpf ogt, %18, %19 : vector<16x128xf32>
    %21 = arith.andi %16, %20 : vector<16x128xi1>
    %c128_i32 = arith.constant 128 : i32
    %22 = vector.broadcast %c128_i32 : i32 to vector<16x128xi32>
    %23 = arith.select %21, %4, %22 : vector<16x128xi1>, vector<16x128xi32>
    %cst_9 = arith.constant dense<2147483647> : vector<16xi32>
    %24 = vector.multi_reduction <minsi>, %23, %cst_9 [1] : vector<16x128xi32> to vector<16xi32>
    %25 = vector.shape_cast %24 : vector<16xi32> to vector<16x1xi32>
    %26 = vector.broadcast %25 : vector<16x1xi32> to vector<16x128xi32>
    %27 = arith.cmpi sle, %4, %26 : vector<16x128xi32>
    %28 = arith.andi %16, %27 : vector<16x128xi1>
    %29 = vector.broadcast %8 : vector<16x1xi1> to vector<16x128xi1>
    %30 = arith.andi %28, %29 : vector<16x128xi1>
    %31 = vector.broadcast %14 : vector<16x1xf32> to vector<16x128xf32>
    %32 = arith.subf %2, %31 : vector<16x128xf32>
    %cst_10 = arith.constant 1.000000e-01 : f32
    %33 = vector.broadcast %cst_10 : f32 to vector<16x128xf32>
    %34 = arith.addf %32, %33 : vector<16x128xf32>
    %cst_11 = arith.constant 0.000000e+00 : f32
    %35 = vector.broadcast %cst_11 : f32 to vector<16x128xf32>
    %36 = arith.maximumf %34, %35 : vector<16x128xf32>
    %cst_12 = arith.constant 0.000000e+00 : f32
    %37 = vector.broadcast %cst_12 : f32 to vector<16x128xf32>
    %38 = arith.select %30, %36, %37 : vector<16x128xi1>, vector<16x128xf32>
    %cst_13 = arith.constant dense<0.000000e+00> : vector<16xf32>
    %39 = vector.multi_reduction <add>, %38, %cst_13 [1] : vector<16x128xf32> to vector<16xf32>
    %40 = vector.shape_cast %39 : vector<16xf32> to vector<16x1xf32>
    %41 = arith.extui %30 : vector<16x128xi1> to vector<16x128xi32>
    %42 = arith.sitofp %41 : vector<16x128xi32> to vector<16x128xf32>
    %cst_14 = arith.constant dense<0.000000e+00> : vector<16xf32>
    %43 = vector.multi_reduction <add>, %42, %cst_14 [1] : vector<16x128xf32> to vector<16xf32>
    %44 = vector.shape_cast %43 : vector<16xf32> to vector<16x1xf32>
    %45 = tpu.iota {dimensions = array<i32: 1>} : vector<16x2xi32>
    %c0_i32_15 = arith.constant 0 : i32
    %46 = vector.broadcast %c0_i32_15 : i32 to vector<16x2xi32>
    %47 = arith.cmpi eq, %45, %46 : vector<16x2xi32>
    %48 = vector.shape_cast %40 : vector<16x1xf32> to vector<16x1xf32>
    %49 = vector.broadcast %48 : vector<16x1xf32> to vector<16x2xf32>
    %50 = vector.shape_cast %44 : vector<16x1xf32> to vector<16x1xf32>
    %51 = vector.broadcast %50 : vector<16x1xf32> to vector<16x2xf32>
    %52 = arith.select %47, %49, %51 : vector<16x2xi1>, vector<16x2xf32>
    %c0_16 = arith.constant 0 : index
    %c0_17 = arith.constant 0 : index
    %53 = vector.load %arg4[%c0_16, %c0_17] : memref<16x2xf32, #tpu.memory_space<vmem>>, vector<16x2xf32>
    tpu.vector_store %arg4[%c0_16, %c0_17], %52 {strides = array<i32>} : memref<16x2xf32, #tpu.memory_space<vmem>>, vector<16x2xf32>,
    return
  }
  func.func @transform_0(%arg0: i32) -> (i32, i32) {
    %c0_i32 = arith.constant 0 : i32
    %c0_i32_0 = arith.constant 0 : i32
    return %arg0, %c0_i32 : i32, i32
  }
  func.func @transform_1(%arg0: i32) -> (i32, i32) {
    %c0_i32 = arith.constant 0 : i32
    %c0_i32_0 = arith.constant 0 : i32
    %c0_i32_1 = arith.constant 0 : i32
    return %c0_i32, %c0_i32_0 : i32, i32
  }
  func.func @transform_2(%arg0: i32) -> (i32, i32) {
    %c0_i32 = arith.constant 0 : i32
    %c0_i32_0 = arith.constant 0 : i32
    return %arg0, %c0_i32 : i32, i32
  }
  func.func @transform_3(%arg0: i32) -> (i32, i32) {
    %c0_i32 = arith.constant 0 : i32
    %c0_i32_0 = arith.constant 0 : i32
    return %arg0, %c0_i32 : i32, i32
  }
}

</mosaic_0001>

<llo_original>
// kernel: tpu_custom_call.1
$region0: #{tpu_custom_call.1}
  #allocation0 [shape = 'u32[]', space=smem, size = 0x4, offset = 0x4, fixed_abs, tag = 'smem constant byte address 0x4 - core index']
  #allocation1 [shape = 'u32[144,128]{1,0:T(1,128)}', space=vmem, size = 0x12000, scoped, tag = 'internal scratch']
  %s0 = inlined_call_operand.vmem [shape: bf16[48,128], index: 0, kind: input, shape index: {}]
  %s1 = inlined_call_operand.hbm [shape: bf16[128,128], index: 1, kind: input, shape index: {}]
  %s2 = inlined_call_operand.vmem [shape: s32[48,1], index: 2, kind: input, shape index: {}]
  %s3 = inlined_call_operand.vmem [shape: f32[48,2], index: 3, kind: output, shape index: {}]
  %s4 = sld [smem:[#allocation0]]
  $region49: #{tpu_custom_call.1} parent=0
    _
  %s6 = ssub.s32 1, %s4
  %s7 = scalar_select 0, %s6, %s4
  $region1: #{tpu_custom_call.1} parent=0
    #allocation2 [shape = 'u8[32768]{0}', space=vmem, size = 0x8000, scoped, tag = 'input window, operand 1, single buffered']
    #allocation3 [shape = 's32[2]{0}', space=sflag, size = 0x8, scoped, tag = 'scoped memory for tpu_custom_call.1']
    %8 = vsyncpa [#allocation3], 0
    loop: start=0, step=1, limit=5
    $region2: #{tpu_custom_call.1} parent=1 // loop_pre_header
      _
    $region3: #{tpu_custom_call.1} parent=1 // loop_header
      %s10 = sphi 0, %s14
      %p11 = scmp.ge.s32.totalorder %s10, 5
      %s20 = sphi 0, %s22
      %s23 = sphi 0, %s20
      %s24 = sphi 0, %s23
      %s40 = sphi 0, %s24
      %s44 = sphi 0, %s44
      %s46 = sphi 0, %s44
      %s47 = sphi 0, %s46
      %s61 = sphi 0, %s47
      %s67 = sphi 0, %s69
      %s70 = sphi 0, %s67
      %s71 = sphi 0, %s70
      %s87 = sphi 0, %s71
      %s93 = sphi 0, %s95
      %s96 = sphi 0, %s93
      %s97 = sphi 0, %s96
      %s113 = sphi 0, %s97
    $region4: #{tpu_custom_call.1} parent=1 // loop_header_branch
      %13 = sbr.rel (%p11) target = $region8
    $region5: #{tpu_custom_call.1} parent=1 // loop_body
      %s15 = ssub.s32 %s10, 1
      %s16 = ssub.s32 %s10, 2
      %s17 = sadd.s32 %s10, 1
      %s18 = ssub.s32 %s10, %s17
      %p19 = scmp.eq.s32.totalorder %s18, 0
      %s21 = sadd.s32 %s20, 1
      %s22 = scalar_select %p19, %s20, %s21
      %p25 = pneg %p19
      %p26 = scmp.eq.s32.totalorder %s10, 2
      %p27 = por %p25, %p26
      %p28 = scmp.ne.s32.totalorder %s20, %s23
      %p29 = scmp.eq.s32.totalorder %s10, 0
      %p30 = por %p28, %p29
      %p31 = scmp.ne.s32.totalorder %s20, %s23
      %p32 = scmp.eq.s32.totalorder %s15, 2
      %p33 = por %p31, %p32
      %p34 = scmp.ne.s32.totalorder %s23, %s24
      %p35 = scmp.eq.s32.totalorder %s15, 0
      %p36 = por %p34, %p35
      %p37 = scmp.ne.s32.totalorder %s23, %s24
      %p38 = scmp.eq.s32.totalorder %s16, 2
      %p39 = por %p37, %p38
      %p41 = scmp.ne.s32.totalorder %s24, %s40
      %p42 = scmp.eq.s32.totalorder %s16, 0
      %p43 = por %p41, %p42
      %s45 = sadd.s32 %s44, 1
      %p48 = scmp.eq.s32.totalorder %s10, 2
      %p49 = scmp.ne.s32.totalorder %s44, %s46
      %p50 = scmp.eq.s32.totalorder %s10, 0
      %p51 = por %p49, %p50
      %p52 = scmp.ne.s32.totalorder %s44, %s46
      %p53 = scmp.eq.s32.totalorder %s15, 2
      %p54 = por %p52, %p53
      %p55 = scmp.ne.s32.totalorder %s46, %s47
      %p56 = scmp.eq.s32.totalorder %s15, 0
      %p57 = por %p55, %p56
      %p58 = scmp.ne.s32.totalorder %s46, %s47
      %p59 = scmp.eq.s32.totalorder %s16, 2
      %p60 = por %p58, %p59
      %p62 = scmp.ne.s32.totalorder %s47, %s61
      %p63 = scmp.eq.s32.totalorder %s16, 0
      %p64 = por %p62, %p63
      %s65 = ssub.s32 %s10, %s17
      %p66 = scmp.eq.s32.totalorder %s65, 0
      %s68 = sadd.s32 %s67, 1
      %s69 = scalar_select %p66, %s67, %s68
      %p72 = pneg %p66
      %p73 = scmp.eq.s32.totalorder %s10, 2
      %p74 = por %p72, %p73
      %p75 = scmp.ne.s32.totalorder %s67, %s70
      %p76 = scmp.eq.s32.totalorder %s10, 0
      %p77 = por %p75, %p76
      %p78 = scmp.ne.s32.totalorder %s67, %s70
      %p79 = scmp.eq.s32.totalorder %s15, 2
      %p80 = por %p78, %p79
      %p81 = scmp.ne.s32.totalorder %s70, %s71
      %p82 = scmp.eq.s32.totalorder %s15, 0
      %p83 = por %p81, %p82
      %p84 = scmp.ne.s32.totalorder %s70, %s71
      %p85 = scmp.eq.s32.totalorder %s16, 2
      %p86 = por %p84, %p85
      %p88 = scmp.ne.s32.totalorder %s71, %s87
      %p89 = scmp.eq.s32.totalorder %s16, 0
      %p90 = por %p88, %p89
      %s91 = ssub.s32 %s10, %s17
      %p92 = scmp.eq.s32.totalorder %s91, 0
      %s94 = sadd.s32 %s93, 1
      %s95 = scalar_select %p92, %s93, %s94
      %p98 = pneg %p92
      %p99 = scmp.eq.s32.totalorder %s10, 2
      %p100 = por %p98, %p99
      %p101 = scmp.ne.s32.totalorder %s93, %s96
      %p102 = scmp.eq.s32.totalorder %s10, 0
      %p103 = por %p101, %p102
      %p104 = scmp.ne.s32.totalorder %s93, %s96
      %p105 = scmp.eq.s32.totalorder %s15, 2
      %p106 = por %p104, %p105
      %p107 = scmp.ne.s32.totalorder %s96, %s97
      %p108 = scmp.eq.s32.totalorder %s15, 0
      %p109 = por %p107, %p108
      %p110 = scmp.ne.s32.totalorder %s96, %s97
      %p111 = scmp.eq.s32.totalorder %s16, 2
      %p112 = por %p110, %p111
      %p114 = scmp.ne.s32.totalorder %s97, %s113
      %p115 = scmp.eq.s32.totalorder %s16, 0
      %p116 = por %p114, %p115
      %p117 = scmp.le.s32.totalorder 1, %s10
      %p118 = scmp.lt.s32.totalorder %s10, 4
      %p119 = pnand %p117, %p118
      %p120 = pneg %p119
      // Predicated region
      $region9: #{tpu_custom_call.1} parent=5 // pred_check
        _
      $region10: #{tpu_custom_call.1} parent=5 // pred_check_branch
        %122 = sbr.rel (%p119) target = $region12
      $region11: #{tpu_custom_call.1} parent=5 // pred_region
        %s123 = ssub.s32 %s10, 1
        // Predicated region
        $region13: #{tpu_custom_call.1} parent=11 // pred_check
          %p124 = pneg %p57
        $region14: #{tpu_custom_call.1} parent=11 // pred_check_branch
          %126 = sbr.rel (%p124) target = $region16
        $region15: #{tpu_custom_call.1} parent=11 // pred_region
          %s128 = ssub.s32 1024, 1024
          %129 = vsyncadd [#allocation3], %s128
          %s130 = sshll.u32 [#allocation2], 4
          %s131 = int_to_ptr.vmem [resolvable:$true] %s130
          %136 = dma.hbm_to_vmem [thread:$0]  %s1, 1024, %s131, [#allocation3], 64, 64, 4
        $region16: #{tpu_custom_call.1} parent=11 // pred_fallthru
          _
      $region12: #{tpu_custom_call.1} parent=5 // pred_fallthru
        _
      %p137 = scmp.lt.s32.totalorder %s10, 3
      // Predicated region
      $region17: #{tpu_custom_call.1} parent=5 // pred_check
        %p138 = pneg %p137
      $region18: #{tpu_custom_call.1} parent=5 // pred_check_branch
        %140 = sbr.rel (%p138) target = $region20
      $region19: #{tpu_custom_call.1} parent=5 // pred_region
        // Predicated region
        $region21: #{tpu_custom_call.1} parent=19 // pred_check
          %p141 = pneg %p30
        $region22: #{tpu_custom_call.1} parent=19 // pred_check_branch
          %143 = sbr.rel (%p141) target = $region24
        $region23: #{tpu_custom_call.1} parent=19 // pred_region
          %s144 = smul.u32 2, %s10
          %p145 = scmp.lt.s32.totalorder %s144, 5
          %s146 = scalar_select %p145, %s144, 5
          %s147 = smul.addr %s146, 4
          %s148 = scalar_lea.vmem %s0, %s147
          %s149 = smul.u32 2, %s10
        $region24: #{tpu_custom_call.1} parent=19 // pred_fallthru
          _
        // Predicated region
        $region25: #{tpu_custom_call.1} parent=19 // pred_check
          %p150 = pneg %p77
        $region26: #{tpu_custom_call.1} parent=19 // pred_check_branch
          %152 = sbr.rel (%p150) target = $region28
        $region27: #{tpu_custom_call.1} parent=19 // pred_region
          %s153 = smul.u32 2, %s10
          %p154 = scmp.lt.s32.totalorder %s153, 5
          %s155 = scalar_select %p154, %s153, 5
          %s156 = smul.addr %s155, 8
          %s157 = scalar_lea.vmem %s2, %s156
          %s158 = smul.u32 2, %s10
        $region28: #{tpu_custom_call.1} parent=19 // pred_fallthru
          _
      $region20: #{tpu_custom_call.1} parent=5 // pred_fallthru
        _
      %p159 = scmp.le.s32.totalorder 1, %s10
      %p160 = scmp.lt.s32.totalorder %s10, 4
      %p161 = pnand %p159, %p160
      %p162 = pneg %p161
      // Predicated region
      $region29: #{tpu_custom_call.1} parent=5 // pred_check
        _
      $region30: #{tpu_custom_call.1} parent=5 // pred_check_branch
        %164 = sbr.rel (%p161) target = $region32
      $region31: #{tpu_custom_call.1} parent=5 // pred_region
        %s165 = ssub.s32 %s10, 1
        // Predicated region
        $region33: #{tpu_custom_call.1} parent=31 // pred_check
          %p166 = pneg %p57
        $region34: #{tpu_custom_call.1} parent=31 // pred_check_branch
          %168 = sbr.rel (%p166) target = $region36
        $region35: #{tpu_custom_call.1} parent=31 // pred_region
          %169 = dma.done [#allocation3], 1024
        $region36: #{tpu_custom_call.1} parent=31 // pred_fallthru
          _
        %s170 = smul.u32 2, %s15
        %p171 = scmp.lt.s32.totalorder %s170, 5
        %s172 = scalar_select %p171, %s170, 5
        %s173 = smul.addr %s172, 4
        %s174 = scalar_lea.vmem %s0, %s173
        %p175 = pneg %p36
        %p176 = pneg %p33
        %p177 = pneg %p57
        %p178 = pneg %p54
        %s179 = smul.u32 2, %s15
        %p180 = scmp.lt.s32.totalorder %s179, 5
        %s181 = scalar_select %p180, %s179, 5
        %s182 = smul.addr %s181, 8
        %s183 = scalar_lea.vmem %s2, %s182
        %p184 = pneg %p83
        %p185 = pneg %p80
        %p186 = pneg %p109
        %p187 = pneg %p106
        %s188 = smul.u32 2, %s15
        %p189 = scmp.lt.s32.totalorder %s188, 5
        %s190 = scalar_select %p189, %s188, 5
        %s191 = smul.addr %s190, 8
        %s192 = scalar_lea.vmem %s3, %s191
        %s193 = smul.u32 2, %s15
        %p194 = scmp.lt.s32.totalorder %s193, 5
        %s195 = scalar_select %p194, %s193, 5
        %s196 = smul.addr %s195, 4
        %s197 = scalar_lea.vmem %s0, %s196
        %s198 = smul.u32 2, %s15
        %s199 = smul.u32 2, %s15
        %p200 = scmp.lt.s32.totalorder %s199, 5
        %s201 = scalar_select %p200, %s199, 5
        %s202 = smul.addr %s201, 8
        %s203 = scalar_lea.vmem %s2, %s202
        %s204 = smul.u32 2, %s15
        %s205 = smul.u32 2, %s15
        %p206 = scmp.lt.s32.totalorder %s205, 5
        %s207 = scalar_select %p206, %s205, 5
        %s208 = smul.addr %s207, 8
        %s209 = scalar_lea.vmem %s3, %s208
        %s210 = smul.u32 2, %s15
        %v212 = vld [vmem:[%s197] sm:$0xf]
        %v213 = vld [vmem:[%s197 + $0x4] sm:$0xf]
        %v214 = vld [vmem:[#allocation2] sm:$0xf]
        %v215 = vld [vmem:[#allocation2 + $0x4] sm:$0xf]
        %v216 = vld [vmem:[#allocation2 + $0x8] sm:$0xf]
        %v217 = vld [vmem:[#allocation2 + $0xc] sm:$0xf]
        %v218 = vld [vmem:[#allocation2 + $0x10] sm:$0xf]
        %v219 = vld [vmem:[#allocation2 + $0x14] sm:$0xf]
        %v220 = vld [vmem:[#allocation2 + $0x18] sm:$0xf]
        %v221 = vld [vmem:[#allocation2 + $0x1c] sm:$0xf]
        %v222 = vld [vmem:[#allocation2 + $0x20] sm:$0xf]
        %v223 = vld [vmem:[#allocation2 + $0x24] sm:$0xf]
        %v224 = vld [vmem:[#allocation2 + $0x28] sm:$0xf]
        %v225 = vld [vmem:[#allocation2 + $0x2c] sm:$0xf]
        %v226 = vld [vmem:[#allocation2 + $0x30] sm:$0xf]
        %v227 = vld [vmem:[#allocation2 + $0x34] sm:$0xf]
        %v228 = vld [vmem:[#allocation2 + $0x38] sm:$0xf]
        %v229 = vld [vmem:[#allocation2 + $0x3c] sm:$0xf]
        %v232 = vunpack.c.l.b16 %v212
        %v233 = vunpack.c.l.b16 %v213
        %v234 = vpack.c.b16 %v233, %v232
        %v252 = vunpack.c.l.b16 %v214
        %v253 = vunpack.c.l.b16 %v215
        %v254 = vunpack.c.l.b16 %v216
        %v255 = vunpack.c.l.b16 %v217
        %v256 = vunpack.c.l.b16 %v218
        %v257 = vunpack.c.l.b16 %v219
        %v258 = vunpack.c.l.b16 %v220
        %v259 = vunpack.c.l.b16 %v221
        %v260 = vunpack.c.l.b16 %v222
        %v261 = vunpack.c.l.b16 %v223
        %v262 = vunpack.c.l.b16 %v224
        %v263 = vunpack.c.l.b16 %v225
        %v264 = vunpack.c.l.b16 %v226
        %v265 = vunpack.c.l.b16 %v227
        %v266 = vunpack.c.l.b16 %v228
        %v267 = vunpack.c.l.b16 %v229
        %v268 = vpack.c.b16 %v253, %v252
        %v269 = vpack.c.b16 %v255, %v254
        %v270 = vpack.c.b16 %v257, %v256
        %v271 = vpack.c.b16 %v259, %v258
        %v272 = vpack.c.b16 %v261, %v260
        %v273 = vpack.c.b16 %v263, %v262
        %v274 = vpack.c.b16 %v265, %v264
        %v275 = vpack.c.b16 %v267, %v266
        %284 = vmatprep.subr.bf16.mxu0 0
        %285 = vmatpush1.bf16.msra.mxu0 %v268
        %286 = vmatprep.subr.bf16.mxu0 0
        %287 = vmatpush1.bf16.msra.mxu0 %v269
        %288 = vmatprep.subr.bf16.mxu0 0
        %289 = vmatpush1.bf16.msra.mxu0 %v270
        %290 = vmatprep.subr.bf16.mxu0 0
        %291 = vmatpush1.bf16.msra.mxu0 %v271
        %292 = vmatprep.subr.bf16.mxu0 0
        %293 = vmatpush1.bf16.msra.mxu0 %v272
        %294 = vmatprep.subr.bf16.mxu0 0
        %295 = vmatpush1.bf16.msra.mxu0 %v273
        %296 = vmatprep.subr.bf16.mxu0 0
        %297 = vmatpush1.bf16.msra.mxu0 %v274
        %298 = vmatprep.subr.bf16.mxu0 0
        %299 = vmatpush1.bf16.msra.mxu0 %v275
        %300 = vmatprep.subr.bf16.mxu0 0
        %301 = vmatpush1.bf16.msra.mxu0 0
        %302 = vmatprep.subr.bf16.mxu0 0
        %303 = vmatpush1.bf16.msra.mxu0 0
        %304 = vmatprep.subr.bf16.mxu0 0
        %305 = vmatpush1.bf16.msra.mxu0 0
        %306 = vmatprep.subr.bf16.mxu0 0
        %307 = vmatpush1.bf16.msra.mxu0 0
        %308 = vmatprep.subr.bf16.mxu0 0
        %309 = vmatpush1.bf16.msra.mxu0 0
        %310 = vmatprep.subr.bf16.mxu0 0
        %311 = vmatpush1.bf16.msra.mxu0 0
        %312 = vmatprep.subr.bf16.mxu0 0
        %313 = vmatpush1.bf16.msra.mxu0 0
        %314 = vmatprep.subr.bf16.mxu0 0
        %315 = vmatpush1.bf16.msra.mxu0 0
        %316 = vmatprep.mubr.bf16.mxu0 0
        %317 = vmatmul.mubr.bf16.gmra.mrb[0].mxu0 %v234
        %v318 = vpop.f32.mrb[0].mxu0
        %v319 = vadd.f32 0.0, %v318
        %v320 = vpop.f32.mrb[0].mxu0
        %v321 = vpop.f32.mrb[0].mxu0
        %v322 = vadd.f32 0.0, %v321
        %v323 = vpop.f32.mrb[0].mxu0
        %324 = vdwg.mxu0
        %v325 = vld [vmem:[%s203] sm:$0xff]
        %v326 = vld [vmem:[%s203 + $0x8] sm:$0xff]
        %v327 = vlaneseq
        %v328 = vand.u32 %v327, 127
        %vm329 = vcmp.lt.s32.totalorder %v328, 12
        %vm330 = vcmp.ge.s32.totalorder %v325, 0
        %vm331 = vcmp.ge.s32.totalorder %v326, 0
        %332 = vset.pattern.permute.xlu0 0
        %333 = vperm.xlu0 %332, %v325
        %v334 = vpop.permute.xlu0 %333
        %335 = vset.pattern.permute.xlu0 0
        %336 = vperm.xlu0 %335, %v326
        %v337 = vpop.permute.xlu0 %336
        %vm338 = vcmp.eq.s32.totalorder %v328, %v334
        %vm339 = vcmp.eq.s32.totalorder %v328, %v337
        %v340 = vsel %vm338, %v319, 0.0
        %v341 = vsel %vm339, %v322, 0.0
        %342 = vadd.xlane.f32.xlu0 %v340
        %v343 = vpop.xlane.xlu0 %342
        %344 = vadd.xlane.f32.xlu0 %v341
        %v345 = vpop.xlane.xlu0 %344
        %vm346 = vmxor %vm338, 1
        %vm347 = vmxor %vm339, 1
        %vm348 = vmand %vm329, %vm346
        %vm349 = vmand %vm329, %vm347
        %v350 = vsub.f32 %v343, %v319
        %v351 = vsub.f32 %v345, %v322
        %vm352 = vcmp.gt.f32.partialorder %v350, 0.1
        %vm353 = vcmp.gt.f32.partialorder %v351, 0.1
        %vm354 = vmand %vm348, %vm352
        %vm355 = vmand %vm349, %vm353
        %v356 = vsel %vm354, %v328, 128
        %v357 = vsel %vm355, %v328, 128
        %v358 = vand.u32 %v356, 65535
        %v359 = vshra.s32 %v356, 16
        %v360 = vcvt.s32.f32 %v358
        %v361 = vcvt.s32.f32 %v359
        %362 = vmin.xlane.f32.xlu0 %v361
        %v363 = vpop.xlane.xlu0 %362
        %vm364 = vcmp.eq.f32.partialorder %v361, %v363
        %v365 = vsel %vm364, %v360, inf
        %366 = vmin.xlane.f32.xlu0 %v365
        %v367 = vpop.xlane.xlu0 %366
        %v368 = vcvt.f32.s32 %v367
        %v369 = vcvt.f32.s32 %v363
        %v370 = vshll.u32 %v369, 16
        %v371 = vadd.s32 %v370, %v368
        %v372 = vand.u32 %v357, 65535
        %v373 = vshra.s32 %v357, 16
        %v374 = vcvt.s32.f32 %v372
        %v375 = vcvt.s32.f32 %v373
        %376 = vmin.xlane.f32.xlu0 %v375
        %v377 = vpop.xlane.xlu0 %376
        %vm378 = vcmp.eq.f32.partialorder %v375, %v377
        %v379 = vsel %vm378, %v374, inf
        %380 = vmin.xlane.f32.xlu0 %v379
        %v381 = vpop.xlane.xlu0 %380
        %v382 = vcvt.f32.s32 %v381
        %v383 = vcvt.f32.s32 %v377
        %v384 = vshll.u32 %v383, 16
        %v385 = vadd.s32 %v384, %v382
        %vm386 = vcmp.le.s32.totalorder %v328, %v371
        %vm387 = vcmp.le.s32.totalorder %v328, %v385
        %vm388 = vmand %vm348, %vm386
        %vm389 = vmand %vm349, %vm387
        %v390 = vsel %vm330, 1, 0
        %v391 = vsel %vm331, 1, 0
        %392 = vset.pattern.permute.xlu0 0
        %393 = vperm.xlu0 %392, %v390
        %v394 = vpop.permute.xlu0 %393
        %395 = vset.pattern.permute.xlu0 0
        %396 = vperm.xlu0 %395, %v391
        %v397 = vpop.permute.xlu0 %396
        %vm398 = vcmp.eq.s32.totalorder %v394, 1
        %vm399 = vcmp.eq.s32.totalorder %v397, 1
        %vm400 = vmand %vm388, %vm398
        %vm401 = vmand %vm389, %vm399
        %v402 = vsub.f32 %v319, %v343
        %v403 = vsub.f32 %v322, %v345
        %v404 = vadd.f32 %v402, 0.1
        %v405 = vadd.f32 %v403, 0.1
        %v406 = vmax.f32 %v404, 0.0
        %v407 = vmax.f32 %v405, 0.0
        %v408 = vsel %vm400, %v406, 0.0
        %v409 = vsel %vm401, %v407, 0.0
        %410 = vadd.xlane.f32.xlu0 %v408
        %v411 = vpop.xlane.xlu0 %410
        %412 = vadd.xlane.f32.xlu0 %v409
        %v413 = vpop.xlane.xlu0 %412
        %v414 = vsel %vm400, 1, 0
        %v415 = vsel %vm401, 1, 0
        %v416 = vcvt.s32.f32 %v414
        %v417 = vcvt.s32.f32 %v415
        %418 = vadd.xlane.f32.xlu0 %v416
        %v419 = vpop.xlane.xlu0 %418
        %420 = vadd.xlane.f32.xlu0 %v417
        %v421 = vpop.xlane.xlu0 %420
        %vm422 = vcmp.eq.s32.totalorder %v328, 0
        %v423 = vsel %vm422, %v411, %v419
        %v424 = vsel %vm422, %v413, %v421
        %vm425 = vcmask 15360
        %426 = vst.msk [vmem:[%s209] sm:$0xff] %vm425, %v423
        %427 = vst.msk [vmem:[%s209 + $0x8] sm:$0xff] %vm425, %v424
        %s428 = smul.u32 2, %s15
        %p429 = scmp.lt.s32.totalorder %s428, 5
        %s430 = scalar_select %p429, %s428, 5
        %s431 = smul.addr %s430, 8
        %s432 = scalar_lea.vmem %s3, %s431
        // Predicated region
        $region37: #{tpu_custom_call.1} parent=31 // pred_check
          %p433 = pneg %p106
        $region38: #{tpu_custom_call.1} parent=31 // pred_check_branch
          %435 = sbr.rel (%p433) target = $region40
        $region39: #{tpu_custom_call.1} parent=31 // pred_region
          %s436 = smul.u32 2, %s15
        $region40: #{tpu_custom_call.1} parent=31 // pred_fallthru
          _
      $region32: #{tpu_custom_call.1} parent=5 // pred_fallthru
        _
      %p437 = scmp.le.s32.totalorder 2, %s10
      // Predicated region
      $region41: #{tpu_custom_call.1} parent=5 // pred_check
        %p438 = pneg %p437
      $region42: #{tpu_custom_call.1} parent=5 // pred_check_branch
        %440 = sbr.rel (%p438) target = $region44
      $region43: #{tpu_custom_call.1} parent=5 // pred_region
        %s441 = ssub.s32 %s10, 2
        // Predicated region
        $region45: #{tpu_custom_call.1} parent=43 // pred_check
          %p442 = pneg %p112
        $region46: #{tpu_custom_call.1} parent=43 // pred_check_branch
          %444 = sbr.rel (%p442) target = $region48
        $region47: #{tpu_custom_call.1} parent=43 // pred_region
          %s445 = smul.u32 2, %s16
          %p446 = scmp.lt.s32.totalorder %s445, 5
          %s447 = scalar_select %p446, %s445, 5
          %s448 = smul.addr %s447, 8
          %s449 = scalar_lea.vmem %s3, %s448
        $region48: #{tpu_custom_call.1} parent=43 // pred_fallthru
          _
      $region44: #{tpu_custom_call.1} parent=5 // pred_fallthru
        _
    $region6: #{tpu_custom_call.1} parent=1 // loop_footer
      %s14 = sadd.s32 1, %s10
    $region7: #{tpu_custom_call.1} parent=1 // loop_footer_branch
      %9 = sbr.rel target = $region3
    $region8: #{tpu_custom_call.1} parent=1 // loop_exit
      _
    %450 = vsyncpa [#allocation3], 1
    %s451 = scalar_lea.sflag [#allocation3], 1
    %452 = vsyncpa %s451, 1

</llo_original>
